<compile_context>
chip_gen: v7x
topology: tpu7x:2x2x1
jax: 0.10.0
libtpu: 0.0.40
codegen_flags: <defaults>
</compile_context>

<pallas_src>
import functools

import jax
import jax.numpy as jnp
import numpy as np
from jax import lax
from jax.experimental import pallas as pl
from jax.experimental.pallas import tpu as pltpu


def _norm_affine_relu(y, gamma_c, beta_c, *, eps, negative_slope):
    """Training-mode BatchNorm over a (N, H, Cout) channel slab + affine + ReLU."""
    inv_cnt = 1.0 / float(y.shape[0] * y.shape[1] * y.shape[2])
    # Staged lane -> sublane -> outer reductions (XLU), kept >=2-D throughout.
    mean = jnp.sum(jnp.sum(jnp.sum(y, axis=2, keepdims=True),
                           axis=1, keepdims=True),
                   axis=0, keepdims=True) * inv_cnt                  # (1,1,1)
    d = y - mean
    var = jnp.sum(jnp.sum(jnp.sum(d * d, axis=2, keepdims=True),
                          axis=1, keepdims=True),
                  axis=0, keepdims=True) * inv_cnt                   # biased var
    out = d * (lax.rsqrt(var + eps) * gamma_c) + beta_c
    if negative_slope == 0.0:
        return jnp.maximum(out, 0.0)                                 # nn.ReLU
    return jnp.where(out >= 0.0, out, negative_slope * out)          # nn.LeakyReLU


def _cnr1d_kernel(x_ref, w_ref, gamma_ref, beta_ref, o_ref, y_ref, *,
                  eps, negative_slope, block_h, n_h_tiles):
    """One BN channel per (parallel) grid step; optional H tiling on axis 1."""
    c = pl.program_id(0)

    xb = x_ref[...]                                     # (N, block_h, Cin)
    nb, bh, cin = xb.shape
    cout = o_ref.shape[-1]

    # Linear (no bias) on the MXU with f32 accumulation.
    y = jnp.dot(xb.reshape(nb * bh, cin), w_ref[...],
                preferred_element_type=jnp.float32).reshape(nb, bh, cout)

    if n_h_tiles == 1:
        # Whole channel in one step: normalize straight away, single store.
        o_ref[...] = _norm_affine_relu(
            y, gamma_ref[c], beta_ref[c],
            eps=eps, negative_slope=negative_slope).astype(o_ref.dtype)
    else:
        # Large-M path: stage raw y (f32) in a VMEM scratch that stays
        # resident across the H tiles of this channel; finalize on last tile.
        hi = pl.program_id(1)
        h0 = pl.multiple_of(hi * block_h, block_h)
        y_ref[:, pl.ds(h0, block_h), :] = y

        @pl.when(hi == n_h_tiles - 1)
        def _():
            o_ref[...] = _norm_affine_relu(
                y_ref[...], gamma_ref[c], beta_ref[c],
                eps=eps, negative_slope=negative_slope).astype(o_ref.dtype)


def _choose_block_h(n, h, cin, itemsize, target_block_bytes):
    """Largest H tile (multiple of 8 dividing H) whose x block fits the budget.

    Returns the full H (single tile, no staging) whenever the whole channel
    fits -- that is both simpler and cheaper on the store port.
    """
    full_bytes = n * h * cin * itemsize
    if full_bytes <= target_block_bytes or h <= 8 or h % 8 != 0:
        return h
    divisors = [d for d in range(8, h + 1, 8) if h % d == 0]
    fitting = [d for d in divisors if n * d * cin * itemsize <= target_block_bytes]
    if fitting:
        return max(fitting)
    return min(divisors)


def cnr1d_forward(x, weight, gamma, beta, *, eps: float = 1e-5,
                  negative_slope: float = 0.0,
                  target_x_block_bytes: int = 8 << 20):
    """Pallas equivalent of CNR1d(nch_in, nch_out, norm='bnorm', relu=0.0).forward.

    x      : (N, C, H, nch_in)  with C == nch_out (BatchNorm2d requirement)
    weight : (nch_out, nch_in)  -- PyTorch nn.Linear weight layout
    gamma  : (C,)               -- BatchNorm2d weight
    beta   : (C,)               -- BatchNorm2d bias
    returns: (N, C, H, nch_out)
    """
    n, c, h, cin = x.shape
    cout, cin_w = weight.shape
    if cin_w != cin:
        raise ValueError(f"weight in_features {cin_w} != x last dim {cin}")
    if c != cout:
        raise ValueError("BatchNorm2d(nch_out) requires x.shape[1] == nch_out "
                         f"(got C={c}, nch_out={cout})")

    w_t = jnp.transpose(weight)                          # (Cin, Cout); tiny, one-time
    itemsize = int(np.dtype(x.dtype).itemsize)
    out_dtype = x.dtype
    out_itemsize = int(np.dtype(out_dtype).itemsize)

    block_h = _choose_block_h(n, h, cin, itemsize, target_x_block_bytes)
    n_h = h // block_h
    assert block_h * n_h == h

    # y staging scratch is only touched on the tiled path; dummy tile otherwise.
    y_scratch_shape = (n, h, cout) if n_h > 1 else (8, 128)

    # Explicit VMEM budget: double-buffered x and weight blocks, output block
    # (resident, conservatively counted twice), staging scratch, + headroom.
    # Clamp to [default scoped 32 MiB, 56 MiB] so the same tiling is safe on
    # v7x's 64 MiB physical VMEM.
    need = (2 * n * block_h * cin * itemsize
            + 2 * cin * cout * 4
            + 2 * n * h * cout * out_itemsize
            + int(np.prod(y_scratch_shape)) * 4)
    vmem_limit = int(min(max(2 * need + (4 << 20), 32 << 20), 56 << 20))

    kernel = functools.partial(_cnr1d_kernel, eps=eps,
                               negative_slope=negative_slope,
                               block_h=block_h, n_h_tiles=n_h)

    return pl.pallas_call(
        kernel,
        grid=(c, n_h),
        in_specs=[
            # x indexed in its native (N, C, H, Cin) layout: one BN channel
            # (dim 1 squeezed) and one H tile per step.  Last two block dims
            # are (block_h, Cin) -> multiple of 8 / full extent: layout-legal.
            pl.BlockSpec((n, None, block_h, cin), lambda ci, hi: (0, ci, hi, 0)),
            # Shared weight tile: constant index map -> stays VMEM-resident.
            pl.BlockSpec((cin, cout), lambda ci, hi: (0, 0)),
            # Per-channel affine params as SMEM scalars.
            pl.BlockSpec(memory_space=pltpu.SMEM),
            pl.BlockSpec(memory_space=pltpu.SMEM),
        ],
        # Output in its native (N, C, H, Cout) layout; block index depends
        # only on the channel so it stays resident across that channel's
        # H tiles and is written back once per channel.
        out_specs=pl.BlockSpec((n, None, h, cout), lambda ci, hi: (0, ci, 0, 0)),
        out_shape=jax.ShapeDtypeStruct((n, c, h, cout), out_dtype),
        scratch_shapes=[pltpu.VMEM(y_scratch_shape, jnp.float32)],
        compiler_params=pltpu.CompilerParams(
            dimension_semantics=("parallel", "arbitrary"),
            vmem_limit_bytes=vmem_limit),
    )(x, w_t, gamma, beta)


def _cnr1d_reference(x, weight, gamma, beta, *, eps=1e-5, negative_slope=0.0):
    """Pure-JAX reference mirroring the PyTorch forward (training-mode BN)."""
    y = jnp.einsum("nchk,ok->ncho", x, weight)           # Linear, no bias
    mean = jnp.mean(y, axis=(0, 2, 3), keepdims=True)
    var = jnp.mean(jnp.square(y - mean), axis=(0, 2, 3), keepdims=True)
    yn = (y - mean) * lax.rsqrt(var + eps)
    yn = yn * gamma.reshape(1, -1, 1, 1) + beta.reshape(1, -1, 1, 1)
    if negative_slope == 0.0:
        return jnp.maximum(yn, 0.0)
    return jnp.where(yn >= 0.0, yn, negative_slope * yn)


def _run_case(key, *, n, h, nch_in, nch_out, target_x_block_bytes=8 << 20):
    k_x, k_w, k_g, k_b = jax.random.split(key, 4)
    c = nch_out                     # BatchNorm2d(nch_out) needs x.shape[1]==nch_out
    x = jax.random.normal(k_x, (n, c, h, nch_in), dtype=jnp.float32)
    weight = 0.1 * jax.random.normal(k_w, (nch_out, nch_in), dtype=jnp.float32)
    # PyTorch default init is gamma=1, beta=0; perturb so the affine path is
    # actually exercised by the check.
    gamma = 1.0 + 0.1 * jax.random.normal(k_g, (c,), dtype=jnp.float32)
    beta = 0.1 * jax.random.normal(k_b, (c,), dtype=jnp.float32)

    out = cnr1d_forward(x, weight, gamma, beta,
                        target_x_block_bytes=target_x_block_bytes)
    out = jax.block_until_ready(out)
    assert out.shape == (n, c, h, nch_out), out.shape

    ref = _cnr1d_reference(x, weight, gamma, beta)
    # Tolerance covers the (unpinned) default f32-on-MXU pass decomposition,
    # which may differ between the Pallas dot and the XLA reference einsum.
    np.testing.assert_allclose(np.asarray(out), np.asarray(ref),
                               atol=1e-2, rtol=1e-2)


if __name__ == "__main__":
    key = jax.random.PRNGKey(0)
    k1, k2 = jax.random.split(key)

    # Case 1: module-consistent small shapes (nch_in=32, nch_out=8, N=2, H=4);
    # whole channel per grid step (single H tile).
    _run_case(k1, n=2, h=4, nch_in=32, nch_out=8)

    # Case 2: longer H with an artificially tiny block budget to exercise the
    # H-tiled (VMEM-bounded) stage-then-finalize path (4 H tiles per channel).
    _run_case(k2, n=2, h=64, nch_in=32, nch_out=8, target_x_block_bytes=4096)

    print("KERNEL_OK")
</pallas_src>

<mosaic_0001>
module attributes {stable_mosaic.version = 11 : i64} {
  func.func @_cnr1d_kernel(%arg0: i32, %arg1: i32, %arg2: memref<2x1x4x32xf32, #tpu.memory_space<vmem>>, %arg3: memref<32x8xf32, #tpu.memory_space<vmem>>, %arg4: memref<8xf32, #tpu.memory_space<smem>>, %arg5: memref<8xf32, #tpu.memory_space<smem>>, %arg6: memref<2x1x4x8xf32, #tpu.memory_space<vmem>>, %arg7: memref<8x128xf32, #tpu.memory_space<vmem>>) attributes {dimension_semantics = [#tpu.dimension_semantics<parallel>, #tpu.dimension_semantics<arbitrary>], iteration_bounds = array<i64: 8, 1>, scalar_prefetch = 0 : i64, scratch_operands = 1 : i64, tpu.core_type = #tpu.core_type<tc>, window_params = [{transform_indices = @transform_0, window_bounds = array<i64: 2, 1, 4, 32>}, {pipeline_mode = #tpu.pipeline_mode<synchronous>, transform_indices = @transform_1, window_bounds = array<i64: 32, 8>}, {transform_indices = @transform_2, window_bounds = array<i64: 8>}, {transform_indices = @transform_3, window_bounds = array<i64: 8>}, {transform_indices = @transform_4, window_bounds = array<i64: 2, 1, 4, 8>}]} {
    %c0 = arith.constant 0 : index
    %c0_0 = arith.constant 0 : index
    %c0_1 = arith.constant 0 : index
    %c0_2 = arith.constant 0 : index
    %0 = vector.load %arg2[%c0, %c0_0, %c0_1, %c0_2] : memref<2x1x4x32xf32, #tpu.memory_space<vmem>>, vector<2x1x4x32xf32>
    %1 = vector.shape_cast %0 : vector<2x1x4x32xf32> to vector<2x4x32xf32>
    %2 = vector.shape_cast %1 : vector<2x4x32xf32> to vector<8x32xf32>
    %c0_3 = arith.constant 0 : index
    %c0_4 = arith.constant 0 : index
    %3 = vector.load %arg3[%c0_3, %c0_4] : memref<32x8xf32, #tpu.memory_space<vmem>>, vector<32x8xf32>
    %cst = arith.constant dense<0.000000e+00> : vector<8x8xf32>
    %4 = tpu.matmul %2, %3, %cst {dimension_numbers = #tpu.dot_dimension_numbers<[1], [0], [0], [1], [0, 0, 1, 1], [], []>} : vector<8x32xf32>, vector<32x8xf32>, vector<8x8xf32> -> vector<8x8xf32>
    %5 = vector.shape_cast %4 : vector<8x8xf32> to vector<2x4x8xf32>
    %6 = arith.index_cast %arg0 : i32 to index
    %7 = memref.load %arg4[%6] : memref<8xf32, #tpu.memory_space<smem>>
    %8 = arith.index_cast %arg0 : i32 to index
    %9 = memref.load %arg5[%8] : memref<8xf32, #tpu.memory_space<smem>>
    %cst_5 = arith.constant dense<0.000000e+00> : vector<2x4xf32>
    %10 = vector.multi_reduction <add>, %5, %cst_5 [2] : vector<2x4x8xf32> to vector<2x4xf32>
    %11 = vector.shape_cast %10 : vector<2x4xf32> to vector<2x4x1xf32>
    %cst_6 = arith.constant dense<0.000000e+00> : vector<2x1xf32>
    %12 = vector.multi_reduction <add>, %11, %cst_6 [1] : vector<2x4x1xf32> to vector<2x1xf32>
    %13 = vector.shape_cast %12 : vector<2x1xf32> to vector<2x1x1xf32>
    %cst_7 = arith.constant dense<0.000000e+00> : vector<1x1xf32>
    %14 = vector.multi_reduction <add>, %13, %cst_7 [0] : vector<2x1x1xf32> to vector<1x1xf32>
    %15 = vector.shape_cast %14 : vector<1x1xf32> to vector<1x1x1xf32>
    %cst_8 = arith.constant 1.562500e-02 : f32
    %16 = vector.broadcast %cst_8 : f32 to vector<1x1x1xf32>
    %17 = arith.mulf %15, %16 : vector<1x1x1xf32>
    %18 = vector.broadcast %17 : vector<1x1x1xf32> to vector<2x4x8xf32>
    %19 = arith.subf %5, %18 : vector<2x4x8xf32>
    %20 = arith.mulf %19, %19 : vector<2x4x8xf32>
    %cst_9 = arith.constant dense<0.000000e+00> : vector<2x4xf32>
    %21 = vector.multi_reduction <add>, %20, %cst_9 [2] : vector<2x4x8xf32> to vector<2x4xf32>
    %22 = vector.shape_cast %21 : vector<2x4xf32> to vector<2x4x1xf32>
    %cst_10 = arith.constant dense<0.000000e+00> : vector<2x1xf32>
    %23 = vector.multi_reduction <add>, %22, %cst_10 [1] : vector<2x4x1xf32> to vector<2x1xf32>
    %24 = vector.shape_cast %23 : vector<2x1xf32> to vector<2x1x1xf32>
    %cst_11 = arith.constant dense<0.000000e+00> : vector<1x1xf32>
    %25 = vector.multi_reduction <add>, %24, %cst_11 [0] : vector<2x1x1xf32> to vector<1x1xf32>
    %26 = vector.shape_cast %25 : vector<1x1xf32> to vector<1x1x1xf32>
    %cst_12 = arith.constant 1.562500e-02 : f32
    %27 = vector.broadcast %cst_12 : f32 to vector<1x1x1xf32>
    %28 = arith.mulf %26, %27 : vector<1x1x1xf32>
    %cst_13 = arith.constant 9.99999974E-6 : f32
    %29 = vector.broadcast %cst_13 : f32 to vector<1x1x1xf32>
    %30 = arith.addf %28, %29 : vector<1x1x1xf32>
    %31 = math.rsqrt %30 : vector<1x1x1xf32>
    %32 = vector.broadcast %7 : f32 to vector<1x1x1xf32>
    %33 = arith.mulf %31, %32 : vector<1x1x1xf32>
    %34 = vector.broadcast %33 : vector<1x1x1xf32> to vector<2x4x8xf32>
    %35 = arith.mulf %19, %34 : vector<2x4x8xf32>
    %36 = vector.broadcast %9 : f32 to vector<2x4x8xf32>
    %37 = arith.addf %35, %36 : vector<2x4x8xf32>
    %cst_14 = arith.constant 0.000000e+00 : f32
    %38 = vector.broadcast %cst_14 : f32 to vector<2x4x8xf32>
    %39 = arith.maximumf %37, %38 : vector<2x4x8xf32>
    %c0_15 = arith.constant 0 : index
    %c0_16 = arith.constant 0 : index
    %c0_17 = arith.constant 0 : index
    %c0_18 = arith.constant 0 : index
    %40 = vector.load %arg6[%c0_15, %c0_16, %c0_17, %c0_18] : memref<2x1x4x8xf32, #tpu.memory_space<vmem>>, vector<2x1x4x8xf32>
    %41 = vector.shape_cast %40 : vector<2x1x4x8xf32> to vector<2x4x8xf32>
    %42 = vector.shape_cast %39 : vector<2x4x8xf32> to vector<2x1x4x8xf32>
    tpu.vector_store %arg6[%c0_15, %c0_16, %c0_17, %c0_18], %42 {strides = array<i32>} : memref<2x1x4x8xf32, #tpu.memory_space<vmem>>, vector<2x1x4x8xf32>,
    return
  }
  func.func @transform_0(%arg0: i32, %arg1: i32) -> (i32, i32, i32, i32) {
    %c0_i32 = arith.constant 0 : i32
    %c0_i32_0 = arith.constant 0 : i32
    %c0_i32_1 = arith.constant 0 : i32
    return %c0_i32, %arg0, %arg1, %c0_i32_0 : i32, i32, i32, i32
  }
  func.func @transform_1(%arg0: i32, %arg1: i32) -> (i32, i32) {
    %c0_i32 = arith.constant 0 : i32
    %c0_i32_0 = arith.constant 0 : i32
    %c0_i32_1 = arith.constant 0 : i32
    return %c0_i32, %c0_i32_0 : i32, i32
  }
  func.func @transform_2(%arg0: i32, %arg1: i32) -> i32 {
    %c0_i32 = arith.constant 0 : i32
    %c0_i32_0 = arith.constant 0 : i32
    return %c0_i32 : i32
  }
  func.func @transform_3(%arg0: i32, %arg1: i32) -> i32 {
    %c0_i32 = arith.constant 0 : i32
    %c0_i32_0 = arith.constant 0 : i32
    return %c0_i32 : i32
  }
  func.func @transform_4(%arg0: i32, %arg1: i32) -> (i32, i32, i32, i32) {
    %c0_i32 = arith.constant 0 : i32
    %c0_i32_0 = arith.constant 0 : i32
    %c0_i32_1 = arith.constant 0 : i32
    %c0_i32_2 = arith.constant 0 : i32
    return %c0_i32, %arg0, %c0_i32_0, %c0_i32_1 : i32, i32, i32, i32
  }
}

</mosaic_0001>

<llo_original>
// kernel: tpu_custom_call.1
$region0: #{tpu_custom_call.1}
  #allocation0 [shape = 'u32[]', space=smem, size = 0x4, offset = 0x4, fixed_abs, tag = 'smem constant byte address 0x4 - core index']
  #allocation1 [shape = 'u32[144,128]{1,0:T(1,128)}', space=vmem, size = 0x12000, scoped, tag = 'internal scratch']
  #allocation2 [shape = 'f32[8,128]{1,0:T(8,128)}', space=vmem, size = 0x1000, scoped, tag = 'scratch operand']
  %s0 = inlined_call_operand.hbm [shape: f32[2,8,4,32], index: 0, kind: input, shape index: {}]
  %s1 = inlined_call_operand.vmem [shape: f32[32,8], index: 1, kind: input, shape index: {}]
  %s2 = inlined_call_operand.vmem [shape: f32[8], index: 2, kind: input, shape index: {}]
  %s3 = inlined_call_operand.vmem [shape: f32[8], index: 3, kind: input, shape index: {}]
  %s4 = inlined_call_operand.hbm [shape: f32[2,8,4,8], index: 4, kind: output, shape index: {}]
  %s5 = sld [smem:[#allocation0]]
  $region61: #{tpu_custom_call.1} parent=0
    _
  %s7 = ssub.s32 1, %s5
  %s8 = scalar_select 0, %s7, %s5
  $region1: #{tpu_custom_call.1} parent=0
    #allocation3 [shape = 'u8[8192]{0}', space=vmem, size = 0x2000, scoped, tag = 'input window, operand 0']
    #allocation4 [shape = 's32[2]{0}', space=sflag, size = 0x8, scoped, tag = 'scoped memory for tpu_custom_call.1']
    #allocation5 [shape = 's32[2]{0}', space=sflag, size = 0x8, scoped, tag = 'scoped memory for tpu_custom_call.1']
    #allocation6 [shape = 's32[2]{0}', space=sflag, size = 0x8, scoped, tag = 'scoped memory for tpu_custom_call.1']
    #allocation7 [shape = 'u8[512]{0}', space=smem, size = 0x200, scoped, tag = 'input window, operand 2, single buffered']
    #allocation8 [shape = 'u8[512]{0}', space=smem, size = 0x200, scoped, tag = 'input window, operand 3, single buffered']
    #allocation9 [shape = 's32[1]{0}', space=sflag, size = 0x4, scoped, tag = 'scoped memory for tpu_custom_call.1']
    #allocation10 [shape = 'u8[8192]{0}', space=vmem, size = 0x2000, scoped, tag = 'output window, operand 0']
    %9 = vsyncpa [#allocation4], 0
    %s10 = scalar_lea.sflag [#allocation4], 1
    %11 = vsyncpa %s10, 0
    %12 = vsyncpa [#allocation6], 0
    %13 = vsyncpa [#allocation9], 0
    %14 = vsyncpa [#allocation5], 0
    %s15 = scalar_lea.sflag [#allocation5], 1
    %16 = vsyncpa %s15, 0
    loop: start=0, step=1, limit=10
    $region2: #{tpu_custom_call.1} parent=1 // loop_pre_header
      _
    $region3: #{tpu_custom_call.1} parent=1 // loop_header
      %s18 = sphi 0, %s22
      %p19 = scmp.ge.s32.totalorder %s18, 10
      %s25 = sphi 0, %s37
      %s26 = sphi 0, %s33
      %s27 = sphi 0, %s25
      %s28 = sphi 0, %s26
      %s29 = sphi 0, %s27
      %s30 = sphi 0, %s28
      %s42 = sphi 0, %s44
      %s45 = sphi 0, %s42
      %s46 = sphi 0, %s45
      %s62 = sphi 0, %s46
      %s66 = sphi 0, %s66
      %s68 = sphi 0, %s66
      %s69 = sphi 0, %s68
      %s83 = sphi 0, %s69
      %s87 = sphi 0, %s87
      %s89 = sphi 0, %s87
      %s90 = sphi 0, %s89
      %s104 = sphi 0, %s90
      %s108 = sphi 0, %s108
      %s110 = sphi 0, %s108
      %s111 = sphi 0, %s110
      %s125 = sphi 0, %s111
      %s131 = sphi 0, %s133
      %s134 = sphi 0, %s131
      %s135 = sphi 0, %s134
      %s151 = sphi 0, %s135
    $region4: #{tpu_custom_call.1} parent=1 // loop_header_branch
      %21 = sbr.rel (%p19) target = $region8
    $region5: #{tpu_custom_call.1} parent=1 // loop_body
      %s23 = ssub.s32 %s18, 1
      %s24 = ssub.s32 %s18, 2
      %s31 = sadd.s32 1, %s26
      %p32 = scmp.ge.s32.totalorder %s31, 1
      %s33 = scalar_select %p32, 0, %s31
      %s34 = sadd.s32 1, %s25
      %s35 = scalar_select %p32, %s34, %s25
      %p36 = scmp.ge.s32.totalorder %s35, 8
      %s37 = scalar_select %p36, 0, %s35
      %s38 = ssub.s32 %s25, %s37
      %s39 = ssub.s32 %s26, %s33
      %s40 = sor.u32 %s38, %s39
      %p41 = scmp.eq.s32.totalorder %s40, 0
      %s43 = sadd.s32 %s42, 1
      %s44 = scalar_select %p41, %s42, %s43
      %p47 = pneg %p41
      %p48 = scmp.eq.s32.totalorder %s18, 7
      %p49 = por %p47, %p48
      %p50 = scmp.ne.s32.totalorder %s42, %s45
      %p51 = scmp.eq.s32.totalorder %s18, 0
      %p52 = por %p50, %p51
      %p53 = scmp.ne.s32.totalorder %s42, %s45
      %p54 = scmp.eq.s32.totalorder %s23, 7
      %p55 = por %p53, %p54
      %p56 = scmp.ne.s32.totalorder %s45, %s46
      %p57 = scmp.eq.s32.totalorder %s23, 0
      %p58 = por %p56, %p57
      %p59 = scmp.ne.s32.totalorder %s45, %s46
      %p60 = scmp.eq.s32.totalorder %s24, 7
      %p61 = por %p59, %p60
      %p63 = scmp.ne.s32.totalorder %s46, %s62
      %p64 = scmp.eq.s32.totalorder %s24, 0
      %p65 = por %p63, %p64
      %s67 = sadd.s32 %s66, 1
      %p70 = scmp.eq.s32.totalorder %s18, 7
      %p71 = scmp.ne.s32.totalorder %s66, %s68
      %p72 = scmp.eq.s32.totalorder %s18, 0
      %p73 = por %p71, %p72
      %p74 = scmp.ne.s32.totalorder %s66, %s68
      %p75 = scmp.eq.s32.totalorder %s23, 7
      %p76 = por %p74, %p75
      %p77 = scmp.ne.s32.totalorder %s68, %s69
      %p78 = scmp.eq.s32.totalorder %s23, 0
      %p79 = por %p77, %p78
      %p80 = scmp.ne.s32.totalorder %s68, %s69
      %p81 = scmp.eq.s32.totalorder %s24, 7
      %p82 = por %p80, %p81
      %p84 = scmp.ne.s32.totalorder %s69, %s83
      %p85 = scmp.eq.s32.totalorder %s24, 0
      %p86 = por %p84, %p85
      %s88 = sadd.s32 %s87, 1
      %p91 = scmp.eq.s32.totalorder %s18, 7
      %p92 = scmp.ne.s32.totalorder %s87, %s89
      %p93 = scmp.eq.s32.totalorder %s18, 0
      %p94 = por %p92, %p93
      %p95 = scmp.ne.s32.totalorder %s87, %s89
      %p96 = scmp.eq.s32.totalorder %s23, 7
      %p97 = por %p95, %p96
      %p98 = scmp.ne.s32.totalorder %s89, %s90
      %p99 = scmp.eq.s32.totalorder %s23, 0
      %p100 = por %p98, %p99
      %p101 = scmp.ne.s32.totalorder %s89, %s90
      %p102 = scmp.eq.s32.totalorder %s24, 7
      %p103 = por %p101, %p102
      %p105 = scmp.ne.s32.totalorder %s90, %s104
      %p106 = scmp.eq.s32.totalorder %s24, 0
      %p107 = por %p105, %p106
      %s109 = sadd.s32 %s108, 1
      %p112 = scmp.eq.s32.totalorder %s18, 7
      %p113 = scmp.ne.s32.totalorder %s108, %s110
      %p114 = scmp.eq.s32.totalorder %s18, 0
      %p115 = por %p113, %p114
      %p116 = scmp.ne.s32.totalorder %s108, %s110
      %p117 = scmp.eq.s32.totalorder %s23, 7
      %p118 = por %p116, %p117
      %p119 = scmp.ne.s32.totalorder %s110, %s111
      %p120 = scmp.eq.s32.totalorder %s23, 0
      %p121 = por %p119, %p120
      %p122 = scmp.ne.s32.totalorder %s110, %s111
      %p123 = scmp.eq.s32.totalorder %s24, 7
      %p124 = por %p122, %p123
      %p126 = scmp.ne.s32.totalorder %s111, %s125
      %p127 = scmp.eq.s32.totalorder %s24, 0
      %p128 = por %p126, %p127
      %s129 = ssub.s32 %s25, %s37
      %p130 = scmp.eq.s32.totalorder %s129, 0
      %s132 = sadd.s32 %s131, 1
      %s133 = scalar_select %p130, %s131, %s132
      %p136 = pneg %p130
      %p137 = scmp.eq.s32.totalorder %s18, 7
      %p138 = por %p136, %p137
      %p139 = scmp.ne.s32.totalorder %s131, %s134
      %p140 = scmp.eq.s32.totalorder %s18, 0
      %p141 = por %p139, %p140
      %p142 = scmp.ne.s32.totalorder %s131, %s134
      %p143 = scmp.eq.s32.totalorder %s23, 7
      %p144 = por %p142, %p143
      %p145 = scmp.ne.s32.totalorder %s134, %s135
      %p146 = scmp.eq.s32.totalorder %s23, 0
      %p147 = por %p145, %p146
      %p148 = scmp.ne.s32.totalorder %s134, %s135
      %p149 = scmp.eq.s32.totalorder %s24, 7
      %p150 = por %p148, %p149
      %p152 = scmp.ne.s32.totalorder %s135, %s151
      %p153 = scmp.eq.s32.totalorder %s24, 0
      %p154 = por %p152, %p153
      %p155 = scmp.le.s32.totalorder 1, %s18
      %p156 = scmp.lt.s32.totalorder %s18, 9
      %p157 = pnand %p155, %p156
      %p158 = pneg %p157
      // Predicated region
      $region9: #{tpu_custom_call.1} parent=5 // pred_check
        _
      $region10: #{tpu_custom_call.1} parent=5 // pred_check_branch
        %160 = sbr.rel (%p157) target = $region12
      $region11: #{tpu_custom_call.1} parent=5 // pred_region
        %s161 = ssub.s32 %s18, 1
        // Predicated region
        $region13: #{tpu_custom_call.1} parent=11 // pred_check
          %p162 = pneg %p79
        $region14: #{tpu_custom_call.1} parent=11 // pred_check_branch
          %164 = sbr.rel (%p162) target = $region16
        $region15: #{tpu_custom_call.1} parent=11 // pred_region
          _
        $region16: #{tpu_custom_call.1} parent=11 // pred_fallthru
          _
        // Predicated region
        $region17: #{tpu_custom_call.1} parent=11 // pred_check
          %p165 = pneg %p100
        $region18: #{tpu_custom_call.1} parent=11 // pred_check_branch
          %167 = sbr.rel (%p165) target = $region20
        $region19: #{tpu_custom_call.1} parent=11 // pred_region
          %s169 = ssub.s32 16, 16
          %170 = vsyncadd [#allocation6], %s169
          %s172 = sshll.u32 %s2, 4
          %s173 = int_to_ptr.vmem [resolvable:$true] %s172
          %175 = dma.vmem_to_smem %s173, 16, [#allocation7], [#allocation6]
        $region20: #{tpu_custom_call.1} parent=11 // pred_fallthru
          _
        // Predicated region
        $region21: #{tpu_custom_call.1} parent=11 // pred_check
          %p176 = pneg %p121
        $region22: #{tpu_custom_call.1} parent=11 // pred_check_branch
          %178 = sbr.rel (%p176) target = $region24
        $region23: #{tpu_custom_call.1} parent=11 // pred_region
          %s180 = ssub.s32 16, 16
          %181 = vsyncadd [#allocation9], %s180
          %s183 = sshll.u32 %s3, 4
          %s184 = int_to_ptr.vmem [resolvable:$true] %s183
          %186 = dma.vmem_to_smem %s184, 16, [#allocation8], [#allocation9]
        $region24: #{tpu_custom_call.1} parent=11 // pred_fallthru
          _
      $region12: #{tpu_custom_call.1} parent=5 // pred_fallthru
        _
      %p187 = scmp.lt.s32.totalorder %s18, 8
      // Predicated region
      $region25: #{tpu_custom_call.1} parent=5 // pred_check
        %p188 = pneg %p187
      $region26: #{tpu_custom_call.1} parent=5 // pred_check_branch
        %190 = sbr.rel (%p188) target = $region28
      $region27: #{tpu_custom_call.1} parent=5 // pred_region
        // Predicated region
        $region29: #{tpu_custom_call.1} parent=27 // pred_check
          %p191 = pneg %p52
        $region30: #{tpu_custom_call.1} parent=27 // pred_check_branch
          %193 = sbr.rel (%p191) target = $region32
        $region31: #{tpu_custom_call.1} parent=27 // pred_region
          %s194 = sand.u32 %s42, 1
          %s195 = scalar_lea.sflag [#allocation4], %s194
          %s196 = sand.u32 %s42, 1
          %s197 = smul.addr %s196, 8
          %s198 = scalar_lea.vmem [#allocation3], %s197
          %s200 = ssub.s32 128, 128
          %201 = vsyncadd %s195, %s200
          %s202 = sadd.s32 %s26, %s25
          %s203 = smul.addr %s202, 64
          %s204 = scalar_lea.hbm %s0, %s203
          %s205 = sshll.u32 %s198, 4
          %s206 = int_to_ptr.vmem [resolvable:$true] %s205
          %211 = dma.hbm_to_vmem [thread:$0]  %s204, 128, %s206, %s195, 512, 64, 4
        $region32: #{tpu_custom_call.1} parent=27 // pred_fallthru
          _
      $region28: #{tpu_custom_call.1} parent=5 // pred_fallthru
        _
      %p212 = scmp.le.s32.totalorder 1, %s18
      %p213 = scmp.lt.s32.totalorder %s18, 9
      %p214 = pnand %p212, %p213
      %p215 = pneg %p214
      // Predicated region
      $region33: #{tpu_custom_call.1} parent=5 // pred_check
        _
      $region34: #{tpu_custom_call.1} parent=5 // pred_check_branch
        %217 = sbr.rel (%p214) target = $region36
      $region35: #{tpu_custom_call.1} parent=5 // pred_region
        %s218 = ssub.s32 %s18, 1
        %s219 = sand.u32 %s45, 1
        %s220 = scalar_lea.sflag [#allocation4], %s219
        %s221 = sand.u32 %s45, 1
        %s222 = smul.addr %s221, 8
        %s223 = scalar_lea.vmem [#allocation3], %s222
        // Predicated region
        $region37: #{tpu_custom_call.1} parent=35 // pred_check
          %p224 = pneg %p58
        $region38: #{tpu_custom_call.1} parent=35 // pred_check_branch
          %226 = sbr.rel (%p224) target = $region40
        $region39: #{tpu_custom_call.1} parent=35 // pred_region
          %227 = dma.done %s220, 128
        $region40: #{tpu_custom_call.1} parent=35 // pred_fallthru
          _
        // Predicated region
        $region41: #{tpu_custom_call.1} parent=35 // pred_check
          %p228 = pneg %p100
        $region42: #{tpu_custom_call.1} parent=35 // pred_check_branch
          %230 = sbr.rel (%p228) target = $region44
        $region43: #{tpu_custom_call.1} parent=35 // pred_region
          %231 = dma.done [#allocation6], 16
        $region44: #{tpu_custom_call.1} parent=35 // pred_fallthru
          _
        // Predicated region
        $region45: #{tpu_custom_call.1} parent=35 // pred_check
          %p232 = pneg %p121
        $region46: #{tpu_custom_call.1} parent=35 // pred_check_branch
          %234 = sbr.rel (%p232) target = $region48
        $region47: #{tpu_custom_call.1} parent=35 // pred_region
          %235 = dma.done [#allocation9], 16
        $region48: #{tpu_custom_call.1} parent=35 // pred_fallthru
          _
        %236 = sfence
        %s237 = sand.u32 %s45, 1
        %s238 = scalar_lea.sflag [#allocation4], %s237
        %s239 = sand.u32 %s45, 1
        %s240 = smul.addr %s239, 8
        %s241 = scalar_lea.vmem [#allocation3], %s240
        %p242 = pneg %p58
        %p243 = pneg %p55
        %p244 = pneg %p79
        %p245 = pneg %p76
        %p246 = pneg %p100
        %p247 = pneg %p97
        %p248 = pneg %p121
        %p249 = pneg %p118
        %p250 = pneg %p147
        %p251 = pneg %p144
        %s252 = sand.u32 %s134, 1
        %s253 = scalar_lea.sflag [#allocation5], %s252
        %s254 = sand.u32 %s134, 1
        %s255 = smul.addr %s254, 8
        %s256 = scalar_lea.vmem [#allocation10], %s255
        %v257 = vld [vmem:[%s223] sm:$0xf]
        %v258 = vld [vmem:[%s223 + $0x4] sm:$0xf]
        %v259 = vld [vmem:[%s1] sm:$0xff]
        %v260 = vld [vmem:[%s1 + $0x8] sm:$0xff]
        %v261 = vld [vmem:[%s1 + $0x10] sm:$0xff]
        %v262 = vld [vmem:[%s1 + $0x18] sm:$0xff]
        %v265 = vcombine.low %v257, %v258
        %vm266 = vcmask 261120
        %v267 = vsel %vm266, %v265, 0
        %269 = vmatprep.subr.mxu0 0.0
        %270 = vmatpush1.msra.mxu0 %v259
        %271 = vmatprep.subr.mxu0 0.0
        %272 = vmatpush1.msra.mxu0 %v260
        %273 = vmatprep.subr.mxu0 0.0
        %274 = vmatpush1.msra.mxu0 %v261
        %275 = vmatprep.subr.mxu0 0.0
        %276 = vmatpush1.msra.mxu0 %v262
        %277 = vmatprep.subr.mxu0 0.0
        %278 = vmatpush1.msra.mxu0 0.0
        %279 = vmatprep.subr.mxu0 0.0
        %280 = vmatpush1.msra.mxu0 0.0
        %281 = vmatprep.subr.mxu0 0.0
        %282 = vmatpush1.msra.mxu0 0.0
        %283 = vmatprep.subr.mxu0 0.0
        %284 = vmatpush1.msra.mxu0 0.0
        %285 = vmatprep.subr.mxu0 0.0
        %286 = vmatpush1.msra.mxu0 0.0
        %287 = vmatprep.subr.mxu0 0.0
        %288 = vmatpush1.msra.mxu0 0.0
        %289 = vmatprep.subr.mxu0 0.0
        %290 = vmatpush1.msra.mxu0 0.0
        %291 = vmatprep.subr.mxu0 0.0
        %292 = vmatpush1.msra.mxu0 0.0
        %293 = vmatprep.subr.mxu0 0.0
        %294 = vmatpush1.msra.mxu0 0.0
        %295 = vmatprep.subr.mxu0 0.0
        %296 = vmatpush1.msra.mxu0 0.0
        %297 = vmatprep.subr.mxu0 0.0
        %298 = vmatpush1.msra.mxu0 0.0
        %299 = vmatprep.subr.mxu0 0.0
        %300 = vmatpush1.msra.mxu0 0.0
        %301 = vmatprep.subr.mxu0 0.0
        %302 = vmatpush1.msra.mxu0 0.0
        %303 = vmatprep.subr.mxu0 0.0
        %304 = vmatpush1.msra.mxu0 0.0
        %305 = vmatprep.subr.mxu0 0.0
        %306 = vmatpush1.msra.mxu0 0.0
        %307 = vmatprep.subr.mxu0 0.0
        %308 = vmatpush1.msra.mxu0 0.0
        %309 = vmatprep.subr.mxu0 0.0
        %310 = vmatpush1.msra.mxu0 0.0
        %311 = vmatprep.subr.mxu0 0.0
        %312 = vmatpush1.msra.mxu0 0.0
        %313 = vmatprep.subr.mxu0 0.0
        %314 = vmatpush1.msra.mxu0 0.0
        %315 = vmatprep.subr.mxu0 0.0
        %316 = vmatpush1.msra.mxu0 0.0
        %317 = vmatprep.subr.mxu0 0.0
        %318 = vmatpush1.msra.mxu0 0.0
        %319 = vmatprep.subr.mxu0 0.0
        %320 = vmatpush1.msra.mxu0 0.0
        %321 = vmatprep.subr.mxu0 0.0
        %322 = vmatpush1.msra.mxu0 0.0
        %323 = vmatprep.subr.mxu0 0.0
        %324 = vmatpush1.msra.mxu0 0.0
        %325 = vmatprep.subr.mxu0 0.0
        %326 = vmatpush1.msra.mxu0 0.0
        %327 = vmatprep.subr.mxu0 0.0
        %328 = vmatpush1.msra.mxu0 0.0
        %329 = vmatprep.subr.mxu0 0.0
        %330 = vmatpush1.msra.mxu0 0.0
        %331 = vmatprep.subr.mxu0 0.0
        %332 = vmatpush1.msra.mxu0 0.0
        %333 = vmatprep.mubr.f32.mxu0 0.0
        %334 = vmatmul.mubr.f32.gmra.mrb[0].mxu0 %v267
        %v335 = vpop.f32.mrb[0].mxu0
        %v336 = vadd.f32 0.0, %v335
        %v337 = vpop.f32.mrb[0].mxu0
        %338 = vdwg.mxu0
        %v340 = vcombine.high %v336, %v336
        %s342 = sld [smem:[#allocation7 + %s27]]
        %s343 = sld [smem:[#allocation8 + %s27]]
        %vm344 = vcmask 60416
        %v345 = vsel %vm344, %v336, 0.0
        %346 = vadd.xlane.f32.xlu0 %v345
        %v347 = vpop.xlane.xlu0 %346
        %v348 = vsel %vm344, %v340, 0.0
        %349 = vadd.xlane.f32.xlu0 %v348
        %v350 = vpop.xlane.xlu0 %349
        %vm351 = vcmask 1043456
        %v352 = vsel %vm351, %v347, 0.0
        %v353 = vrot.slane %v352, 4
        %v354 = vadd.f32 %v352, %v353
        %v355 = vrot.slane %v354, 2
        %v356 = vadd.f32 %v354, %v355
        %v357 = vrot.slane %v356, 1
        %v358 = vadd.f32 %v356, %v357
        %v359 = vsel %vm351, %v350, 0.0
        %v360 = vrot.slane %v359, 4
        %v361 = vadd.f32 %v359, %v360
        %v362 = vrot.slane %v361, 2
        %v363 = vadd.f32 %v361, %v362
        %v364 = vrot.slane %v363, 1
        %v365 = vadd.f32 %v363, %v364
        %v366 = vadd.f32 %v358, %v365
        %v367 = vmul.f32 %v366, 0.015625
        %v368 = vsub.f32 %v336, %v367
        %v369 = vsub.f32 %v340, %v367
        %v370 = vmul.f32 %v368, %v368
        %v371 = vmul.f32 %v369, %v369
        %v372 = vsel %vm344, %v370, 0.0
        %373 = vadd.xlane.f32.xlu0 %v372
        %v374 = vpop.xlane.xlu0 %373
        %v375 = vsel %vm344, %v371, 0.0
        %376 = vadd.xlane.f32.xlu0 %v375
        %v377 = vpop.xlane.xlu0 %376
        %v378 = vsel %vm351, %v374, 0.0
        %v379 = vrot.slane %v378, 4
        %v380 = vadd.f32 %v378, %v379
        %v381 = vrot.slane %v380, 2
        %v382 = vadd.f32 %v380, %v381
        %v383 = vrot.slane %v382, 1
        %v384 = vadd.f32 %v382, %v383
        %v385 = vsel %vm351, %v377, 0.0
        %v386 = vrot.slane %v385, 4
        %v387 = vadd.f32 %v385, %v386
        %v388 = vrot.slane %v387, 2
        %v389 = vadd.f32 %v387, %v388
        %v390 = vrot.slane %v389, 1
        %v391 = vadd.f32 %v389, %v390
        %v392 = vadd.f32 %v384, %v391
        %v393 = vmul.f32 %v392, 0.015625
        %v394 = vadd.f32 %v393, 1e-05
        %v395 = vrsqrt.pop %v394
        %v396 = vstv %s342
        %v397 = vmul.f32 %v395, %v396
        %v398 = vmul.f32 %v368, %v397
        %v399 = vmul.f32 %v369, %v397
        %v400 = vstv %s343
        %v401 = vadd.f32 %v398, %v400
        %v402 = vadd.f32 %v399, %v400
        %v403 = vmax.f32 %v401, 0.0
        %v404 = vmax.f32 %v402, 0.0
        %405 = vst.msk [vmem:[%s256] sm:$0xf] %vm344, %v403
        %406 = vst.msk [vmem:[%s256 + $0x4] sm:$0xf] %vm344, %v404
        %s407 = sand.u32 %s134, 1
        %s408 = scalar_lea.sflag [#allocation5], %s407
        %s409 = sand.u32 %s134, 1
        %s410 = smul.addr %s409, 8
        %s411 = scalar_lea.vmem [#allocation10], %s410
        // Predicated region
        $region49: #{tpu_custom_call.1} parent=35 // pred_check
          %p412 = pneg %p144
        $region50: #{tpu_custom_call.1} parent=35 // pred_check_branch
          %414 = sbr.rel (%p412) target = $region52
        $region51: #{tpu_custom_call.1} parent=35 // pred_region
          %s416 = ssub.s32 128, 128
          %417 = vsyncadd %s408, %s416
          %s418 = smul.addr %s27, 64
          %s419 = scalar_lea.hbm %s4, %s418
          %s420 = sshll.u32 %s411, 4
          %s421 = int_to_ptr.vmem [resolvable:$true] %s420
          %426 = dma.vmem_to_hbm [thread:$0]  %s421, 128, %s419, %s408, 64, 512, 4
        $region52: #{tpu_custom_call.1} parent=35 // pred_fallthru
          _
      $region36: #{tpu_custom_call.1} parent=5 // pred_fallthru
        _
      %p427 = scmp.le.s32.totalorder 2, %s18
      // Predicated region
      $region53: #{tpu_custom_call.1} parent=5 // pred_check
        %p428 = pneg %p427
      $region54: #{tpu_custom_call.1} parent=5 // pred_check_branch
        %430 = sbr.rel (%p428) target = $region56
      $region55: #{tpu_custom_call.1} parent=5 // pred_region
        %s431 = ssub.s32 %s18, 2
        // Predicated region
        $region57: #{tpu_custom_call.1} parent=55 // pred_check
          %p432 = pneg %p150
        $region58: #{tpu_custom_call.1} parent=55 // pred_check_branch
          %434 = sbr.rel (%p432) target = $region60
        $region59: #{tpu_custom_call.1} parent=55 // pred_region
          %s435 = sand.u32 %s135, 1
          %s436 = scalar_lea.sflag [#allocation5], %s435
          %s437 = sand.u32 %s135, 1
          %s438 = smul.addr %s437, 8
          %s439 = scalar_lea.vmem [#allocation10], %s438
          %440 = dma.done %s436, 128
        $region60: #{tpu_custom_call.1} parent=55 // pred_fallthru
          _
      $region56: #{tpu_custom_call.1} parent=5 // pred_fallthru
        _
    $region6: #{tpu_custom_call.1} parent=1 // loop_footer
      %s22 = sadd.s32 1, %s18
    $region7: #{tpu_custom_call.1} parent=1 // loop_footer_branch
      %17 = sbr.rel target = $region3
    $region8: #{tpu_custom_call.1} parent=1 // loop_exit
      _
    %441 = vsyncpa [#allocation4], 1
    %s442 = scalar_lea.sflag [#allocation4], 1
    %443 = vsyncpa %s442, 1
    %444 = vsyncpa [#allocation5], 1
    %s445 = scalar_lea.sflag [#allocation5], 1
    %446 = vsyncpa %s445, 1
    %447 = vsyncpa [#allocation6], 1
    %s448 = scalar_lea.sflag [#allocation6], 1
    %449 = vsyncpa %s448, 1
    %450 = vsyncpa [#allocation9], 1

</llo_original>
